<compile_context>
chip_gen: v5e
topology: v5e:2x2
jax: 0.10.0
libtpu: 0.0.40
codegen_flags: <defaults>
</compile_context>

<pallas_src>
import functools

import jax
import jax.numpy as jnp
from jax.experimental import pallas as pl
from jax.experimental.pallas import tpu as pltpu


# Tile-size caps (multiples of the alignment they are paired with).
TM_MAX = 256   # batch tile (bf16-friendly: multiple of 16)
TN_MAX = 512   # class/output tile (lane-dense: multiple of 128)
TK_MAX = 2048  # feature/reduction tile (multiple of 128)


def _round_up(x: int, m: int) -> int:
    return ((x + m - 1) // m) * m


def _split_tile(dim: int, align: int, max_tile: int):
    """Pick a tile size (multiple of `align`, <= max_tile) minimising padding.

    Returns (tile, padded_dim) with padded_dim % tile == 0 and padded_dim >= dim.
    """
    d = _round_up(dim, align)
    n = max(1, -(-d // max_tile))          # number of tiles (ceil)
    t = _round_up(-(-d // n), align)       # per-tile extent, aligned
    return t, n * t


def linear_kernel(x_ref, w_ref, b_ref, o_ref, acc_ref):
    """One (tm, tn) output tile, accumulated over the K (features) grid axis.

    x_ref: (tm, tk) bf16   w_ref: (tk, tn) bf16   b_ref: (1, tn) f32
    o_ref: (tm, tn) f32    acc_ref: (tm, tn) f32 VMEM scratch
    """
    k = pl.program_id(2)

    @pl.when(k == 0)
    def _init():
        # Fold the bias into the accumulator init (broadcast over rows once).
        acc_ref[...] = jnp.broadcast_to(
            b_ref[...].astype(jnp.float32), acc_ref.shape
        )

    acc_ref[...] += jnp.dot(
        x_ref[...], w_ref[...], preferred_element_type=jnp.float32
    )

    @pl.when(k == pl.num_programs(2) - 1)
    def _finalize():
        o_ref[...] = acc_ref[...].astype(o_ref.dtype)


def init_classifier_params(w_pt, b):
    """One-time parameter prep (call OUTSIDE jit / once at model init).

    w_pt: (C, F) torch nn.Linear weight layout; b: (C,) bias.
    Returns (w_t_padded_bf16 of shape (Fp, Cp), bias_padded_f32 of shape (1, Cp)).
    Doing the transpose + pad + bf16 cast here avoids a full-weight HBM copy
    on every forward call.
    """
    C, F = w_pt.shape
    tn, Cp = _split_tile(C, 128, TN_MAX)
    tk, Fp = _split_tile(F, 128, TK_MAX)
    del tn, tk
    w_t = jnp.pad(jnp.asarray(w_pt).T, ((0, Fp - F), (0, Cp - C)))
    w_t = w_t.astype(jnp.bfloat16)
    b_row = jnp.pad(jnp.asarray(b, jnp.float32), (0, Cp - C)).reshape(1, Cp)
    return w_t, b_row


@functools.partial(jax.jit, static_argnames=("num_classes",))
def normal_classifier_forward(x, w_t, b_row, *, num_classes):
    """y = x @ W_pt.T + b  with pre-prepared (padded, bf16) w_t = W_pt.T."""
    B, F = x.shape
    Fp, Cp = w_t.shape
    C = num_classes

    # Tile sizes are re-derived from the logical dims; they must match the
    # padding baked into the prepared params.
    tn, Cp_expected = _split_tile(C, 128, TN_MAX)
    tk, Fp_expected = _split_tile(F, 128, TK_MAX)
    assert (Fp, Cp) == (Fp_expected, Cp_expected), (
        "w_t/b_row were not prepared with init_classifier_params for this F/C"
    )
    tm, Bp = _split_tile(B, 16, TM_MAX)  # 16: bf16 sublane packing

    # Per-call work on x only: bf16 cast (+ pad only if ragged).
    xp = x.astype(jnp.bfloat16)
    if (Bp, Fp) != (B, F):
        xp = jnp.pad(xp, ((0, Bp - B), (0, Fp - F)))  # zero-pad: exact reduction

    grid = (Cp // tn, Bp // tm, Fp // tk)  # (j: C outer, i: B, k: F reduction)
    k_steps = grid[2]

    # Weight spec: C-outer index map -> when k_steps == 1 the (Fp, tn) weight
    # tile stays resident in VMEM across every batch tile (no re-DMA). For
    # deep heads with multiple K steps, triple-buffer the dominant weight DMA.
    if k_steps > 1:
        w_spec = pl.BlockSpec((tk, tn), lambda j, i, k: (k, j),
                              pipeline_mode=pl.Buffered(3))
    else:
        w_spec = pl.BlockSpec((tk, tn), lambda j, i, k: (k, j))

    cost = pl.CostEstimate(
        flops=2 * Bp * Fp * Cp,
        transcendentals=0,
        bytes_accessed=(Bp * Fp * 2 + Fp * Cp * 2 + Cp * 4 + Bp * Cp * 4),
    )

    yp = pl.pallas_call(
        linear_kernel,
        out_shape=jax.ShapeDtypeStruct((Bp, Cp), jnp.float32),
        grid=grid,
        in_specs=[
            pl.BlockSpec((tm, tk), lambda j, i, k: (i, k)),  # x (bf16)
            w_spec,                                          # w_t (bf16)
            pl.BlockSpec((1, tn), lambda j, i, k: (0, j)),   # bias (f32)
        ],
        out_specs=pl.BlockSpec((tm, tn), lambda j, i, k: (i, j)),
        scratch_shapes=[pltpu.VMEM((tm, tn), jnp.float32)],
        compiler_params=pltpu.CompilerParams(
            dimension_semantics=("parallel", "parallel", "arbitrary"),
            vmem_limit_bytes=32 * 1024 * 1024,
        ),
        cost_estimate=cost,
    )(xp, w_t, b_row)

    # Slice back to logical shape only when padding was actually needed.
    if (Bp, Cp) != (B, C):
        yp = yp[:B, :C]
    return yp
    # TODO(synk): the `stochastic` flag of the original module is unused by its
    # forward pass and is therefore not represented here.


if __name__ == "__main__":
    # Small shapes consistent with the module: num_features=32, num_classes=16, batch=8.
    B, F, C = 8, 32, 16

    key = jax.random.PRNGKey(0)
    kx, kw, kb = jax.random.split(key, 3)

    # Deterministic param init (mimics nn.Linear's uniform(-1/sqrt(F), 1/sqrt(F))).
    bound = 1.0 / jnp.sqrt(jnp.float32(F))
    w_pt = jax.random.uniform(kw, (C, F), jnp.float32, -bound, bound)  # torch (C, F)
    b = jax.random.uniform(kb, (C,), jnp.float32, -bound, bound)
    x = jax.random.normal(kx, (B, F), jnp.float32)

    # One-time parameter prep (transpose + pad + bf16 cast), outside jit.
    w_t, b_row = init_classifier_params(w_pt, b)

    y = normal_classifier_forward(x, w_t, b_row, num_classes=C)
    y = jax.block_until_ready(y)

    # Reference check (f32 reference vs. bf16-input / f32-accumulate kernel).
    y_ref = x @ w_pt.T + b
    assert y.shape == (B, C)
    assert y.dtype == jnp.float32
    assert jnp.allclose(y, y_ref, atol=2e-2, rtol=2e-2)

    print("KERNEL_OK")
</pallas_src>

<mosaic_0001>
module attributes {stable_mosaic.version = 11 : i64} {
  func.func @linear_kernel(%arg0: i32, %arg1: i32, %arg2: i32, %arg3: memref<16x128xbf16, #tpu.memory_space<vmem>>, %arg4: memref<128x128xbf16, #tpu.memory_space<vmem>>, %arg5: memref<1x128xf32, #tpu.memory_space<vmem>>, %arg6: memref<16x128xf32, #tpu.memory_space<vmem>>, %arg7: memref<16x128xf32, #tpu.memory_space<vmem>>) attributes {dimension_semantics = [#tpu.dimension_semantics<parallel>, #tpu.dimension_semantics<parallel>, #tpu.dimension_semantics<arbitrary>], iteration_bounds = array<i64: 1, 1, 1>, scalar_prefetch = 0 : i64, scratch_operands = 1 : i64, tpu.core_type = #tpu.core_type<tc>, window_params = [{transform_indices = @transform_0, window_bounds = array<i64: 16, 128>}, {transform_indices = @transform_1, window_bounds = array<i64: 128, 128>}, {transform_indices = @transform_2, window_bounds = array<i64: 1, 128>}, {transform_indices = @transform_3, window_bounds = array<i64: 16, 128>}]} {
    %c0_i32 = arith.constant 0 : i32
    %0 = arith.cmpi eq, %arg2, %c0_i32 : i32
    %1 = arith.extui %0 : i1 to i32
    %c0_i32_0 = arith.constant 0 : i32
    %2 = arith.cmpi ne, %1, %c0_i32_0 : i32
    scf.if %2 {
      %c0_10 = arith.constant 0 : index
      %c0_11 = arith.constant 0 : index
      %12 = vector.load %arg5[%c0_10, %c0_11] : memref<1x128xf32, #tpu.memory_space<vmem>>, vector<1x128xf32>
      %13 = vector.shape_cast %12 : vector<1x128xf32> to vector<1x128xf32>
      %14 = vector.broadcast %13 : vector<1x128xf32> to vector<16x128xf32>
      %c0_12 = arith.constant 0 : index
      %c0_13 = arith.constant 0 : index
      %15 = vector.load %arg7[%c0_12, %c0_13] : memref<16x128xf32, #tpu.memory_space<vmem>>, vector<16x128xf32>
      tpu.vector_store %arg7[%c0_12, %c0_13], %14 {strides = array<i32>} : memref<16x128xf32, #tpu.memory_space<vmem>>, vector<16x128xf32>,
    } else {
    }
    %c0 = arith.constant 0 : index
    %c0_1 = arith.constant 0 : index
    %3 = vector.load %arg7[%c0, %c0_1] : memref<16x128xf32, #tpu.memory_space<vmem>>, vector<16x128xf32>
    %c0_2 = arith.constant 0 : index
    %c0_3 = arith.constant 0 : index
    %4 = vector.load %arg3[%c0_2, %c0_3] : memref<16x128xbf16, #tpu.memory_space<vmem>>, vector<16x128xbf16>
    %c0_4 = arith.constant 0 : index
    %c0_5 = arith.constant 0 : index
    %5 = vector.load %arg4[%c0_4, %c0_5] : memref<128x128xbf16, #tpu.memory_space<vmem>>, vector<128x128xbf16>
    %cst = arith.constant dense<0.000000e+00> : vector<16x128xf32>
    %6 = tpu.matmul %4, %5, %cst {dimension_numbers = #tpu.dot_dimension_numbers<[1], [0], [0], [1], [0, 0, 1, 1], [], []>} : vector<16x128xbf16>, vector<128x128xbf16>, vector<16x128xf32> -> vector<16x128xf32>
    %7 = arith.addf %3, %6 : vector<16x128xf32>
    %c0_6 = arith.constant 0 : index
    %c0_7 = arith.constant 0 : index
    %8 = vector.load %arg7[%c0_6, %c0_7] : memref<16x128xf32, #tpu.memory_space<vmem>>, vector<16x128xf32>
    tpu.vector_store %arg7[%c0_6, %c0_7], %7 {strides = array<i32>} : memref<16x128xf32, #tpu.memory_space<vmem>>, vector<16x128xf32>,
    %c0_i32_8 = arith.constant 0 : i32
    %9 = arith.cmpi eq, %arg2, %c0_i32_8 : i32
    %10 = arith.extui %9 : i1 to i32
    %c0_i32_9 = arith.constant 0 : i32
    %11 = arith.cmpi ne, %10, %c0_i32_9 : i32
    scf.if %11 {
      %c0_10 = arith.constant 0 : index
      %c0_11 = arith.constant 0 : index
      %12 = vector.load %arg7[%c0_10, %c0_11] : memref<16x128xf32, #tpu.memory_space<vmem>>, vector<16x128xf32>
      %c0_12 = arith.constant 0 : index
      %c0_13 = arith.constant 0 : index
      %13 = vector.load %arg6[%c0_12, %c0_13] : memref<16x128xf32, #tpu.memory_space<vmem>>, vector<16x128xf32>
      tpu.vector_store %arg6[%c0_12, %c0_13], %12 {strides = array<i32>} : memref<16x128xf32, #tpu.memory_space<vmem>>, vector<16x128xf32>,
    } else {
    }
    return
  }
  func.func @transform_0(%arg0: i32, %arg1: i32, %arg2: i32) -> (i32, i32) {
    %c0_i32 = arith.constant 0 : i32
    return %arg1, %arg2 : i32, i32
  }
  func.func @transform_1(%arg0: i32, %arg1: i32, %arg2: i32) -> (i32, i32) {
    %c0_i32 = arith.constant 0 : i32
    return %arg2, %arg0 : i32, i32
  }
  func.func @transform_2(%arg0: i32, %arg1: i32, %arg2: i32) -> (i32, i32) {
    %c0_i32 = arith.constant 0 : i32
    %c0_i32_0 = arith.constant 0 : i32
    return %c0_i32, %arg0 : i32, i32
  }
  func.func @transform_3(%arg0: i32, %arg1: i32, %arg2: i32) -> (i32, i32) {
    %c0_i32 = arith.constant 0 : i32
    return %arg1, %arg0 : i32, i32
  }
}

</mosaic_0001>

<llo_original>
// kernel: normal_classifier_forward.1
$region0: #{normal_classifier_forward.1}
  #allocation0 [shape = 'u32[]', space=smem, size = 0x4, offset = 0x4, fixed_abs, tag = 'smem constant byte address 0x4 - core index']
  #allocation1 [shape = 'u32[72,128]{1,0:T(1,128)}', space=vmem, size = 0x9000, scoped, tag = 'internal scratch']
  #allocation2 [shape = 'f32[16,128]{1,0:T(8,128)}', space=vmem, size = 0x2000, scoped, tag = 'scratch operand']
  %s0 = inlined_call_operand.vmem [shape: bf16[16,128], index: 0, kind: input, shape index: {}]
  %s1 = inlined_call_operand.hbm [shape: bf16[128,128], index: 1, kind: input, shape index: {}]
  %s2 = inlined_call_operand.vmem [shape: f32[1,128], index: 2, kind: input, shape index: {}]
  %s3 = inlined_call_operand.vmem [shape: f32[16,128], index: 3, kind: output, shape index: {}]
  %s4 = sld [smem:[#allocation0]]
  $region34: #{normal_classifier_forward.1} parent=0
    _
  %s6 = ssub.s32 1, %s4
  %s7 = scalar_select 0, %s6, %s4
  $region1: #{normal_classifier_forward.1} parent=0
    #allocation3 [shape = 'u8[32768]{0}', space=vmem, size = 0x8000, scoped, tag = 'input window, operand 1, single buffered']
    #allocation4 [shape = 's32[1]{0}', space=sflag, size = 0x4, scoped, tag = 'scoped memory for normal_classifier_forward.1']
    %8 = vsyncpa [#allocation4], 0
    // Predicated region
    $region2: #{normal_classifier_forward.1} parent=1 // pred_check
      _
    $region3: #{normal_classifier_forward.1} parent=1 // pred_check_branch
      %10 = sbr.rel (0) target = $region5
    $region4: #{normal_classifier_forward.1} parent=1 // pred_region
      _
    $region5: #{normal_classifier_forward.1} parent=1 // pred_fallthru
      _
    // Predicated region
    $region6: #{normal_classifier_forward.1} parent=1 // pred_check
      _
    $region7: #{normal_classifier_forward.1} parent=1 // pred_check_branch
      %12 = sbr.rel (0) target = $region9
    $region8: #{normal_classifier_forward.1} parent=1 // pred_region
      %14 = vsyncadd [#allocation4], 0
      %s15 = sshll.u32 %s1, 4
      %s16 = int_to_ptr.hbm [resolvable:$true] %s15
      %s17 = sshll.u32 [#allocation3], 4
      %s18 = int_to_ptr.vmem [resolvable:$true] %s17
      %23 = dma.hbm_to_vmem [thread:$0]  %s16, 1024, %s18, [#allocation4], 64, 64, 4
    $region9: #{normal_classifier_forward.1} parent=1 // pred_fallthru
      _
    // Predicated region
    $region10: #{normal_classifier_forward.1} parent=1 // pred_check
      _
    $region11: #{normal_classifier_forward.1} parent=1 // pred_check_branch
      %25 = sbr.rel (0) target = $region13
    $region12: #{normal_classifier_forward.1} parent=1 // pred_region
      _
    $region13: #{normal_classifier_forward.1} parent=1 // pred_fallthru
      _
    // Predicated region
    $region14: #{normal_classifier_forward.1} parent=1 // pred_check
      _
    $region15: #{normal_classifier_forward.1} parent=1 // pred_check_branch
      %27 = sbr.rel (0) target = $region17
    $region16: #{normal_classifier_forward.1} parent=1 // pred_region
      %29 = dma.done [#allocation4], 1024
    $region17: #{normal_classifier_forward.1} parent=1 // pred_fallthru
      _
    %p30 = scmp.eq.s32.totalorder 0, 0
    // Predicated region
    $region18: #{normal_classifier_forward.1} parent=1 // pred_check
      %p31 = pneg %p30
    $region19: #{normal_classifier_forward.1} parent=1 // pred_check_branch
      %33 = sbr.rel (%p31) target = $region21
    $region20: #{normal_classifier_forward.1} parent=1 // pred_region
      %v34 = vld [vmem:[%s2] sm:$0x1]
      %v36 = vperm.slane %v34, 0
      %38 = vst [vmem:[#allocation2] sm:$0xff] %v36
      %39 = vst [vmem:[#allocation2 + $0x8] sm:$0xff] %v36
    $region21: #{normal_classifier_forward.1} parent=1 // pred_fallthru
      _
    %v40 = vld [vmem:[#allocation2] sm:$0xff]
    %v41 = vld [vmem:[#allocation2 + $0x8] sm:$0xff]
    %v42 = vld [vmem:[%s0] sm:$0xf]
    %v43 = vld [vmem:[%s0 + $0x4] sm:$0xf]
    %v44 = vld [vmem:[#allocation3] sm:$0xf]
    %v45 = vld [vmem:[#allocation3 + $0x4] sm:$0xf]
    %v46 = vld [vmem:[#allocation3 + $0x8] sm:$0xf]
    %v47 = vld [vmem:[#allocation3 + $0xc] sm:$0xf]
    %v48 = vld [vmem:[#allocation3 + $0x10] sm:$0xf]
    %v49 = vld [vmem:[#allocation3 + $0x14] sm:$0xf]
    %v50 = vld [vmem:[#allocation3 + $0x18] sm:$0xf]
    %v51 = vld [vmem:[#allocation3 + $0x1c] sm:$0xf]
    %v52 = vld [vmem:[#allocation3 + $0x20] sm:$0xf]
    %v53 = vld [vmem:[#allocation3 + $0x24] sm:$0xf]
    %v54 = vld [vmem:[#allocation3 + $0x28] sm:$0xf]
    %v55 = vld [vmem:[#allocation3 + $0x2c] sm:$0xf]
    %v56 = vld [vmem:[#allocation3 + $0x30] sm:$0xf]
    %v57 = vld [vmem:[#allocation3 + $0x34] sm:$0xf]
    %v58 = vld [vmem:[#allocation3 + $0x38] sm:$0xf]
    %v59 = vld [vmem:[#allocation3 + $0x3c] sm:$0xf]
    %v62 = vunpack.c.l.b16 %v42
    %v63 = vunpack.c.l.b16 %v43
    %v64 = vpack.c.b16 %v63, %v62
    %v82 = vunpack.c.l.b16 %v44
    %v83 = vunpack.c.l.b16 %v45
    %v84 = vunpack.c.l.b16 %v46
    %v85 = vunpack.c.l.b16 %v47
    %v86 = vunpack.c.l.b16 %v48
    %v87 = vunpack.c.l.b16 %v49
    %v88 = vunpack.c.l.b16 %v50
    %v89 = vunpack.c.l.b16 %v51
    %v90 = vunpack.c.l.b16 %v52
    %v91 = vunpack.c.l.b16 %v53
    %v92 = vunpack.c.l.b16 %v54
    %v93 = vunpack.c.l.b16 %v55
    %v94 = vunpack.c.l.b16 %v56
    %v95 = vunpack.c.l.b16 %v57
    %v96 = vunpack.c.l.b16 %v58
    %v97 = vunpack.c.l.b16 %v59
    %v98 = vpack.c.b16 %v83, %v82
    %v99 = vpack.c.b16 %v85, %v84
    %v100 = vpack.c.b16 %v87, %v86
    %v101 = vpack.c.b16 %v89, %v88
    %v102 = vpack.c.b16 %v91, %v90
    %v103 = vpack.c.b16 %v93, %v92
    %v104 = vpack.c.b16 %v95, %v94
    %v105 = vpack.c.b16 %v97, %v96
    %114 = vmatpush.bf16.msra.mxu0 %v105
    %115 = vmatpush.bf16.msra.mxu0 %v104
    %116 = vmatpush.bf16.msra.mxu0 %v103
    %117 = vmatpush.bf16.msra.mxu0 %v102
    %118 = vmatpush.bf16.msra.mxu0 %v101
    %119 = vmatpush.bf16.msra.mxu0 %v100
    %120 = vmatpush.bf16.msra.mxu0 %v99
    %121 = vmatpush.bf16.msra.mxu0 %v98
    %122 = vmatmul.bf16.gmra.mxu0 %v64
    %v123 = vpop.f32.mrf.mxu0
    %v124 = vadd.f32 0.0, %v123
    %v125 = vpop.f32.mrf.mxu0
    %v126 = vadd.f32 0.0, %v125
    %127 = vdwg.mxu0
    %v128 = vadd.f32 %v40, %v124
    %v129 = vadd.f32 %v41, %v126
    %130 = vst [vmem:[#allocation2] sm:$0xff] %v128
    %131 = vst [vmem:[#allocation2 + $0x8] sm:$0xff] %v129
    // Predicated region
    $region22: #{normal_classifier_forward.1} parent=1 // pred_check
      %p132 = pneg %p30
    $region23: #{normal_classifier_forward.1} parent=1 // pred_check_branch
      %134 = sbr.rel (%p132) target = $region25
    $region24: #{normal_classifier_forward.1} parent=1 // pred_region
      %v135 = vld [vmem:[#allocation2] sm:$0xff]
      %v136 = vld [vmem:[#allocation2 + $0x8] sm:$0xff]
      %137 = vst [vmem:[%s3] sm:$0xff] %v135
      %138 = vst [vmem:[%s3 + $0x8] sm:$0xff] %v136
    $region25: #{normal_classifier_forward.1} parent=1 // pred_fallthru
      _
    // Predicated region
    $region26: #{normal_classifier_forward.1} parent=1 // pred_check
      _
    $region27: #{normal_classifier_forward.1} parent=1 // pred_check_branch
      %140 = sbr.rel (0) target = $region29
    $region28: #{normal_classifier_forward.1} parent=1 // pred_region
      _
    $region29: #{normal_classifier_forward.1} parent=1 // pred_fallthru
      _
    // Predicated region
    $region30: #{normal_classifier_forward.1} parent=1 // pred_check
      _
    $region31: #{normal_classifier_forward.1} parent=1 // pred_check_branch
      %142 = sbr.rel (0) target = $region33
    $region32: #{normal_classifier_forward.1} parent=1 // pred_region
      _
    $region33: #{normal_classifier_forward.1} parent=1 // pred_fallthru
      _
    %143 = vsyncpa [#allocation4], 1

</llo_original>
